<compile_context>
chip_gen: v6e
topology: v6e:2x2x1
jax: 0.10.0
libtpu: 0.0.40
codegen_flags: <defaults>
</compile_context>

<pallas_src>
import jax
import jax.numpy as jnp
from jax.experimental import pallas as pl
from jax.experimental.pallas import tpu as pltpu


def _round_up(n, m):
    return ((n + m - 1) // m) * m


def _pick_row_tile(n_p):
    # n_p is always a multiple of 128; prefer bigger dst-row tiles.
    for cand in (512, 256, 128):
        if n_p % cand == 0:
            return cand
    return 128


def gin_conv_kernel(eps_ref, adj_ref, x_ref, w_ref, s_ref, mask_ref, out_ref):
    """One fused GINConv layer for a block of destination rows.

    eps_ref  : SMEM (1,) f32          -- eps for this layer
    adj_ref  : VMEM [tm, Np]  bf16    -- rows of (A + I) for this dst block
    x_ref    : VMEM [Np, Fin] bf16    -- full node features (resident across grid)
    w_ref    : VMEM [Fin,Fout] bf16   -- Linear weight with BN scale folded in
    s_ref    : VMEM [1, Fout] f32     -- bias*scale + shift
    mask_ref : VMEM [tm, 1]  f32      -- 1.0 for real dst rows, 0.0 for padding
    out_ref  : VMEM [tm, Fout]        -- relu(((A+I)x + eps*x) W' + s'), masked
    """
    i = pl.program_id(0)
    tm = out_ref.shape[0]
    eps = eps_ref[0]

    x_all = x_ref[...]
    # Neighborhood aggregation over all source nodes. adj already holds A + I,
    # so the "+x_i" self term rides inside the MXU pass; only eps*x_i remains.
    agg = jnp.dot(adj_ref[...], x_all, preferred_element_type=jnp.float32)   # MXU

    row0 = pl.multiple_of(i * tm, tm)
    x_dst = x_ref[pl.ds(row0, tm), :].astype(jnp.float32)
    z = agg + eps * x_dst                                                    # VPU

    h = jnp.dot(z.astype(jnp.bfloat16), w_ref[...],
                preferred_element_type=jnp.float32) + s_ref[...]             # MXU + VPU
    h = jnp.maximum(h, 0.0) * mask_ref[...]                                  # ReLU + zero padded rows
    out_ref[...] = h.astype(out_ref.dtype)


def gin_conv_layer(eps, adj, x_pad, w, s, mask, out_dtype):
    """pallas_call wrapper: grid over destination-row blocks (parallel)."""
    n_p, f_in_p = x_pad.shape
    f_out_p = w.shape[1]
    tm = _pick_row_tile(n_p)
    grid = (n_p // tm,)

    out_bytes = jnp.dtype(out_dtype).itemsize
    # Rough double-buffered VMEM footprint; raise the scoped limit with
    # headroom (v5e default is only 16 MiB) but stay well under v7x's 64 MiB.
    vmem_needed = (2 * tm * n_p * 2            # adj row block (bf16)
                   + 2 * n_p * f_in_p * 2      # full x (bf16)
                   + 2 * f_in_p * f_out_p * 2  # folded weights (bf16)
                   + 2 * f_out_p * 4           # shift
                   + 2 * tm * 4                # row mask
                   + 2 * tm * f_out_p * out_bytes)
    vmem_limit = int(min(max(2 * vmem_needed, 32 * 2 ** 20), 48 * 2 ** 20))

    return pl.pallas_call(
        gin_conv_kernel,
        out_shape=jax.ShapeDtypeStruct((n_p, f_out_p), out_dtype),
        grid=grid,
        in_specs=[
            pl.BlockSpec(memory_space=pltpu.MemorySpace.SMEM),      # eps (1,)
            pl.BlockSpec((tm, n_p), lambda i: (i, 0)),              # adj row block
            pl.BlockSpec((n_p, f_in_p), lambda i: (0, 0)),          # full x (resident)
            pl.BlockSpec((f_in_p, f_out_p), lambda i: (0, 0)),      # folded W
            pl.BlockSpec((1, f_out_p), lambda i: (0, 0)),           # folded shift
            pl.BlockSpec((tm, 1), lambda i: (i, 0)),                # dst row mask
        ],
        out_specs=pl.BlockSpec((tm, f_out_p), lambda i: (i, 0)),
        compiler_params=pltpu.CompilerParams(
            dimension_semantics=("parallel",),
            vmem_limit_bytes=vmem_limit,
        ),
    )(eps, adj, x_pad, w, s, mask)


def _fold_linear_bn(w, b, bn_scale, bn_shift, fin_p, fout_p):
    """Fold eval-mode BatchNorm into Linear and zero-pad to lane-dense shapes."""
    fin, fout = w.shape
    w_folded = w * bn_scale[None, :]
    s_folded = b * bn_scale + bn_shift
    w_pad = jnp.zeros((fin_p, fout_p), jnp.float32).at[:fin, :fout].set(w_folded)
    s_pad = jnp.zeros((1, fout_p), jnp.float32).at[0, :fout].set(s_folded)
    return w_pad.astype(jnp.bfloat16), s_pad


def prepare_gin(edge_index, n, params):
    """One-time host prep (cache this; it must NOT run per forward call)."""
    n_feat, n_hid = params["w1"].shape
    n_p = _round_up(max(n, 1), 128)        # lane-dense adjacency (128-aligned)
    f0_p = _round_up(n_feat, 128)
    fh_p = _round_up(n_hid, 128)

    src, dst = edge_index[0], edge_index[1]
    # Dense (A + I) built directly in bf16 (no f32 intermediate). Self-loops
    # only for the n real nodes; padded rows/cols stay exactly zero, so padded
    # nodes can never contaminate real rows.
    # NOTE: bf16 is exact only for integer edge multiplicities <= 256.
    adj = (jnp.zeros((n_p, n_p), jnp.bfloat16)
           .at[dst, src].add(1.0)
           .at[jnp.arange(n), jnp.arange(n)].add(1.0))

    mask = jnp.zeros((n_p, 1), jnp.float32).at[:n, :].set(1.0)

    w1p, s1p = _fold_linear_bn(params["w1"], params["b1"],
                               params["bn1_scale"], params["bn1_shift"], f0_p, fh_p)
    w2p, s2p = _fold_linear_bn(params["w2"], params["b2"],
                               params["bn2_scale"], params["bn2_shift"], fh_p, fh_p)

    return {
        "n": n, "n_p": n_p, "n_feat": n_feat, "n_hid": n_hid,
        "f0_p": f0_p, "fh_p": fh_p,
        "adj": adj, "mask": mask,
        "w1": w1p, "s1": s1p, "w2": w2p, "s2": s2p,
        "eps1": jnp.asarray([params["eps1"]], jnp.float32),
        "eps2": jnp.asarray([params["eps2"]], jnp.float32),
    }


def gin_forward(x, prep):
    """Per-call work only: pad x -> gc1+relu -> (dropout no-op) -> gc2+relu -> slice."""
    n, n_feat = prep["n"], prep["n_feat"]
    x_pad = (jnp.zeros((prep["n_p"], prep["f0_p"]), jnp.bfloat16)
             .at[:n, :n_feat].set(x.astype(jnp.bfloat16)))

    h1 = gin_conv_layer(prep["eps1"], prep["adj"], x_pad,
                        prep["w1"], prep["s1"], prep["mask"], jnp.bfloat16)
    # dropout: inference no-op
    h2 = gin_conv_layer(prep["eps2"], prep["adj"], h1,
                        prep["w2"], prep["s2"], prep["mask"], jnp.float32)
    return h2[:n, :prep["n_hid"]]


def make_linear_params(key, fan_in, fan_out):
    """Deterministic init mimicking nn.Linear defaults (uniform +/- 1/sqrt(fan_in))."""
    kw, kb = jax.random.split(key)
    bound = 1.0 / jnp.sqrt(jnp.asarray(fan_in, jnp.float32))
    w = jax.random.uniform(kw, (fan_in, fan_out), jnp.float32, -bound, bound)
    b = jax.random.uniform(kb, (fan_out,), jnp.float32, -bound, bound)
    return w, b


def make_bn_affine(num_features, bn_eps=1e-5):
    """BatchNorm1d (eval mode, default init): gamma=1, beta=0, mean=0, var=1."""
    gamma = jnp.ones((num_features,), jnp.float32)
    beta = jnp.zeros((num_features,), jnp.float32)
    running_mean = jnp.zeros((num_features,), jnp.float32)
    running_var = jnp.ones((num_features,), jnp.float32)
    inv_std = 1.0 / jnp.sqrt(running_var + bn_eps)
    scale = gamma * inv_std
    shift = beta - running_mean * scale
    return scale, shift


if __name__ == "__main__":
    key = jax.random.PRNGKey(0)
    k_x, k_edge, k_l1, k_l2 = jax.random.split(key, 4)

    # Small graph: N nodes, n_feat input features, n_hid hidden features.
    N, N_FEAT, N_HID, N_EDGES = 64, 16, 32, 200

    x = jax.random.normal(k_x, (N, N_FEAT), jnp.float32)
    edge_index = jax.random.randint(k_edge, (2, N_EDGES), 0, N, dtype=jnp.int32)

    w1, b1 = make_linear_params(k_l1, N_FEAT, N_HID)
    w2, b2 = make_linear_params(k_l2, N_HID, N_HID)
    bn1_scale, bn1_shift = make_bn_affine(N_HID)
    bn2_scale, bn2_shift = make_bn_affine(N_HID)

    params = {
        "w1": w1, "b1": b1, "bn1_scale": bn1_scale, "bn1_shift": bn1_shift,
        "w2": w2, "b2": b2, "bn2_scale": bn2_scale, "bn2_shift": bn2_shift,
        "eps1": 0.0,  # GINConv train_eps=True initializes eps to 0
        "eps2": 0.0,
    }

    # One-time prep (adjacency scatter + BN folding + padding), cached.
    prep = prepare_gin(edge_index, N, params)

    # Per-forward path is just the two fused pallas_calls (+ pad/slice glue).
    forward = jax.jit(lambda xx: gin_forward(xx, prep))

    out = jax.block_until_ready(forward(x))

    # Pure-JAX f32 reference (kernel uses bf16 MXU inputs -> modest tolerance).
    adj_ref = jnp.zeros((N, N), jnp.float32).at[edge_index[1], edge_index[0]].add(1.0)
    z1 = (1.0 + params["eps1"]) * x + adj_ref @ x
    h1 = jnp.maximum((z1 @ w1 + b1) * bn1_scale + bn1_shift, 0.0)
    z2 = (1.0 + params["eps2"]) * h1 + adj_ref @ h1
    h2 = jnp.maximum((z2 @ w2 + b2) * bn2_scale + bn2_shift, 0.0)

    assert out.shape == (N, N_HID), out.shape
    assert jnp.allclose(out, h2, atol=1e-1, rtol=5e-2), float(jnp.max(jnp.abs(out - h2)))

    print("KERNEL_OK")
</pallas_src>

<mosaic_0001>
module attributes {stable_mosaic.version = 11 : i64} {
  func.func @gin_conv_kernel(%arg0: i32, %arg1: memref<1xf32, #tpu.memory_space<smem>>, %arg2: memref<128x128xbf16, #tpu.memory_space<vmem>>, %arg3: memref<128x128xbf16, #tpu.memory_space<vmem>>, %arg4: memref<128x128xbf16, #tpu.memory_space<vmem>>, %arg5: memref<1x128xf32, #tpu.memory_space<vmem>>, %arg6: memref<128x1xf32, #tpu.memory_space<vmem>>, %arg7: memref<128x128xbf16, #tpu.memory_space<vmem>>) attributes {dimension_semantics = [#tpu.dimension_semantics<parallel>], iteration_bounds = array<i64: 1>, scalar_prefetch = 0 : i64, scratch_operands = 0 : i64, tpu.core_type = #tpu.core_type<tc>, window_params = [{transform_indices = @transform_0, window_bounds = array<i64: 1>}, {transform_indices = @transform_1, window_bounds = array<i64: 128, 128>}, {pipeline_mode = #tpu.pipeline_mode<synchronous>, transform_indices = @transform_2, window_bounds = array<i64: 128, 128>}, {pipeline_mode = #tpu.pipeline_mode<synchronous>, transform_indices = @transform_3, window_bounds = array<i64: 128, 128>}, {pipeline_mode = #tpu.pipeline_mode<synchronous>, transform_indices = @transform_4, window_bounds = array<i64: 1, 128>}, {transform_indices = @transform_5, window_bounds = array<i64: 128, 1>}, {transform_indices = @transform_6, window_bounds = array<i64: 128, 128>}]} {
    %c0 = arith.constant 0 : index
    %0 = memref.load %arg1[%c0] : memref<1xf32, #tpu.memory_space<smem>>
    %c0_0 = arith.constant 0 : index
    %c0_1 = arith.constant 0 : index
    %1 = vector.load %arg3[%c0_0, %c0_1] : memref<128x128xbf16, #tpu.memory_space<vmem>>, vector<128x128xbf16>
    %c0_2 = arith.constant 0 : index
    %c0_3 = arith.constant 0 : index
    %2 = vector.load %arg2[%c0_2, %c0_3] : memref<128x128xbf16, #tpu.memory_space<vmem>>, vector<128x128xbf16>
    %cst = arith.constant dense<0.000000e+00> : vector<128x128xf32>
    %3 = tpu.matmul %2, %1, %cst {dimension_numbers = #tpu.dot_dimension_numbers<[1], [0], [0], [1], [0, 0, 1, 1], [], []>} : vector<128x128xbf16>, vector<128x128xbf16>, vector<128x128xf32> -> vector<128x128xf32>
    %c128_i32 = arith.constant 128 : i32
    %4 = arith.muli %arg0, %c128_i32 : i32
    %5 = tpu.assume_multiple %4, 128 : i32
    %6 = arith.index_cast %5 : i32 to index
    %c0_4 = arith.constant 0 : index
    %7 = vector.load %arg3[%6, %c0_4] : memref<128x128xbf16, #tpu.memory_space<vmem>>, vector<128x128xbf16>
    %8 = arith.extf %7 : vector<128x128xbf16> to vector<128x128xf32>
    %9 = vector.broadcast %0 : f32 to vector<128x128xf32>
    %10 = arith.mulf %9, %8 : vector<128x128xf32>
    %11 = arith.addf %3, %10 : vector<128x128xf32>
    %12 = arith.truncf %11 : vector<128x128xf32> to vector<128x128xbf16>
    %c0_5 = arith.constant 0 : index
    %c0_6 = arith.constant 0 : index
    %13 = vector.load %arg4[%c0_5, %c0_6] : memref<128x128xbf16, #tpu.memory_space<vmem>>, vector<128x128xbf16>
    %cst_7 = arith.constant dense<0.000000e+00> : vector<128x128xf32>
    %14 = tpu.matmul %12, %13, %cst_7 {dimension_numbers = #tpu.dot_dimension_numbers<[1], [0], [0], [1], [0, 0, 1, 1], [], []>} : vector<128x128xbf16>, vector<128x128xbf16>, vector<128x128xf32> -> vector<128x128xf32>
    %c0_8 = arith.constant 0 : index
    %c0_9 = arith.constant 0 : index
    %15 = vector.load %arg5[%c0_8, %c0_9] : memref<1x128xf32, #tpu.memory_space<vmem>>, vector<1x128xf32>
    %16 = vector.broadcast %15 : vector<1x128xf32> to vector<128x128xf32>
    %17 = arith.addf %14, %16 : vector<128x128xf32>
    %cst_10 = arith.constant 0.000000e+00 : f32
    %18 = vector.broadcast %cst_10 : f32 to vector<128x128xf32>
    %19 = arith.maximumf %17, %18 : vector<128x128xf32>
    %c0_11 = arith.constant 0 : index
    %c0_12 = arith.constant 0 : index
    %20 = vector.load %arg6[%c0_11, %c0_12] : memref<128x1xf32, #tpu.memory_space<vmem>>, vector<128x1xf32>
    %21 = vector.broadcast %20 : vector<128x1xf32> to vector<128x128xf32>
    %22 = arith.mulf %19, %21 : vector<128x128xf32>
    %23 = arith.truncf %22 : vector<128x128xf32> to vector<128x128xbf16>
    %c0_13 = arith.constant 0 : index
    %c0_14 = arith.constant 0 : index
    %24 = vector.load %arg7[%c0_13, %c0_14] : memref<128x128xbf16, #tpu.memory_space<vmem>>, vector<128x128xbf16>
    tpu.vector_store %arg7[%c0_13, %c0_14], %23 {strides = array<i32>} : memref<128x128xbf16, #tpu.memory_space<vmem>>, vector<128x128xbf16>,
    return
  }
  func.func @transform_0(%arg0: i32) -> i32 {
    %c0_i32 = arith.constant 0 : i32
    %c0_i32_0 = arith.constant 0 : i32
    return %c0_i32 : i32
  }
  func.func @transform_1(%arg0: i32) -> (i32, i32) {
    %c0_i32 = arith.constant 0 : i32
    %c0_i32_0 = arith.constant 0 : i32
    return %arg0, %c0_i32 : i32, i32
  }
  func.func @transform_2(%arg0: i32) -> (i32, i32) {
    %c0_i32 = arith.constant 0 : i32
    %c0_i32_0 = arith.constant 0 : i32
    %c0_i32_1 = arith.constant 0 : i32
    return %c0_i32, %c0_i32_0 : i32, i32
  }
  func.func @transform_3(%arg0: i32) -> (i32, i32) {
    %c0_i32 = arith.constant 0 : i32
    %c0_i32_0 = arith.constant 0 : i32
    %c0_i32_1 = arith.constant 0 : i32
    return %c0_i32, %c0_i32_0 : i32, i32
  }
  func.func @transform_4(%arg0: i32) -> (i32, i32) {
    %c0_i32 = arith.constant 0 : i32
    %c0_i32_0 = arith.constant 0 : i32
    %c0_i32_1 = arith.constant 0 : i32
    return %c0_i32, %c0_i32_0 : i32, i32
  }
  func.func @transform_5(%arg0: i32) -> (i32, i32) {
    %c0_i32 = arith.constant 0 : i32
    %c0_i32_0 = arith.constant 0 : i32
    return %arg0, %c0_i32 : i32, i32
  }
  func.func @transform_6(%arg0: i32) -> (i32, i32) {
    %c0_i32 = arith.constant 0 : i32
    %c0_i32_0 = arith.constant 0 : i32
    return %arg0, %c0_i32 : i32, i32
  }
}

module attributes {stable_mosaic.version = 11 : i64} {
  func.func @gin_conv_kernel(%arg0: i32, %arg1: memref<1xf32, #tpu.memory_space<smem>>, %arg2: memref<128x128xbf16, #tpu.memory_space<vmem>>, %arg3: memref<128x128xbf16, #tpu.memory_space<vmem>>, %arg4: memref<128x128xbf16, #tpu.memory_space<vmem>>, %arg5: memref<1x128xf32, #tpu.memory_space<vmem>>, %arg6: memref<128x1xf32, #tpu.memory_space<vmem>>, %arg7: memref<128x128xf32, #tpu.memory_space<vmem>>) attributes {dimension_semantics = [#tpu.dimension_semantics<parallel>], iteration_bounds = array<i64: 1>, scalar_prefetch = 0 : i64, scratch_operands = 0 : i64, tpu.core_type = #tpu.core_type<tc>, window_params = [{transform_indices = @transform_0, window_bounds = array<i64: 1>}, {transform_indices = @transform_1, window_bounds = array<i64: 128, 128>}, {pipeline_mode = #tpu.pipeline_mode<synchronous>, transform_indices = @transform_2, window_bounds = array<i64: 128, 128>}, {pipeline_mode = #tpu.pipeline_mode<synchronous>, transform_indices = @transform_3, window_bounds = array<i64: 128, 128>}, {pipeline_mode = #tpu.pipeline_mode<synchronous>, transform_indices = @transform_4, window_bounds = array<i64: 1, 128>}, {transform_indices = @transform_5, window_bounds = array<i64: 128, 1>}, {transform_indices = @transform_6, window_bounds = array<i64: 128, 128>}]} {
    %c0 = arith.constant 0 : index
    %0 = memref.load %arg1[%c0] : memref<1xf32, #tpu.memory_space<smem>>
    %c0_0 = arith.constant 0 : index
    %c0_1 = arith.constant 0 : index
    %1 = vector.load %arg3[%c0_0, %c0_1] : memref<128x128xbf16, #tpu.memory_space<vmem>>, vector<128x128xbf16>
    %c0_2 = arith.constant 0 : index
    %c0_3 = arith.constant 0 : index
    %2 = vector.load %arg2[%c0_2, %c0_3] : memref<128x128xbf16, #tpu.memory_space<vmem>>, vector<128x128xbf16>
    %cst = arith.constant dense<0.000000e+00> : vector<128x128xf32>
    %3 = tpu.matmul %2, %1, %cst {dimension_numbers = #tpu.dot_dimension_numbers<[1], [0], [0], [1], [0, 0, 1, 1], [], []>} : vector<128x128xbf16>, vector<128x128xbf16>, vector<128x128xf32> -> vector<128x128xf32>
    %c128_i32 = arith.constant 128 : i32
    %4 = arith.muli %arg0, %c128_i32 : i32
    %5 = tpu.assume_multiple %4, 128 : i32
    %6 = arith.index_cast %5 : i32 to index
    %c0_4 = arith.constant 0 : index
    %7 = vector.load %arg3[%6, %c0_4] : memref<128x128xbf16, #tpu.memory_space<vmem>>, vector<128x128xbf16>
    %8 = arith.extf %7 : vector<128x128xbf16> to vector<128x128xf32>
    %9 = vector.broadcast %0 : f32 to vector<128x128xf32>
    %10 = arith.mulf %9, %8 : vector<128x128xf32>
    %11 = arith.addf %3, %10 : vector<128x128xf32>
    %12 = arith.truncf %11 : vector<128x128xf32> to vector<128x128xbf16>
    %c0_5 = arith.constant 0 : index
    %c0_6 = arith.constant 0 : index
    %13 = vector.load %arg4[%c0_5, %c0_6] : memref<128x128xbf16, #tpu.memory_space<vmem>>, vector<128x128xbf16>
    %cst_7 = arith.constant dense<0.000000e+00> : vector<128x128xf32>
    %14 = tpu.matmul %12, %13, %cst_7 {dimension_numbers = #tpu.dot_dimension_numbers<[1], [0], [0], [1], [0, 0, 1, 1], [], []>} : vector<128x128xbf16>, vector<128x128xbf16>, vector<128x128xf32> -> vector<128x128xf32>
    %c0_8 = arith.constant 0 : index
    %c0_9 = arith.constant 0 : index
    %15 = vector.load %arg5[%c0_8, %c0_9] : memref<1x128xf32, #tpu.memory_space<vmem>>, vector<1x128xf32>
    %16 = vector.broadcast %15 : vector<1x128xf32> to vector<128x128xf32>
    %17 = arith.addf %14, %16 : vector<128x128xf32>
    %cst_10 = arith.constant 0.000000e+00 : f32
    %18 = vector.broadcast %cst_10 : f32 to vector<128x128xf32>
    %19 = arith.maximumf %17, %18 : vector<128x128xf32>
    %c0_11 = arith.constant 0 : index
    %c0_12 = arith.constant 0 : index
    %20 = vector.load %arg6[%c0_11, %c0_12] : memref<128x1xf32, #tpu.memory_space<vmem>>, vector<128x1xf32>
    %21 = vector.broadcast %20 : vector<128x1xf32> to vector<128x128xf32>
    %22 = arith.mulf %19, %21 : vector<128x128xf32>
    %c0_13 = arith.constant 0 : index
    %c0_14 = arith.constant 0 : index
    %23 = vector.load %arg7[%c0_13, %c0_14] : memref<128x128xf32, #tpu.memory_space<vmem>>, vector<128x128xf32>
    tpu.vector_store %arg7[%c0_13, %c0_14], %22 {strides = array<i32>} : memref<128x128xf32, #tpu.memory_space<vmem>>, vector<128x128xf32>,
    return
  }
  func.func @transform_0(%arg0: i32) -> i32 {
    %c0_i32 = arith.constant 0 : i32
    %c0_i32_0 = arith.constant 0 : i32
    return %c0_i32 : i32
  }
  func.func @transform_1(%arg0: i32) -> (i32, i32) {
    %c0_i32 = arith.constant 0 : i32
    %c0_i32_0 = arith.constant 0 : i32
    return %arg0, %c0_i32 : i32, i32
  }
  func.func @transform_2(%arg0: i32) -> (i32, i32) {
    %c0_i32 = arith.constant 0 : i32
    %c0_i32_0 = arith.constant 0 : i32
    %c0_i32_1 = arith.constant 0 : i32
    return %c0_i32, %c0_i32_0 : i32, i32
  }
  func.func @transform_3(%arg0: i32) -> (i32, i32) {
    %c0_i32 = arith.constant 0 : i32
    %c0_i32_0 = arith.constant 0 : i32
    %c0_i32_1 = arith.constant 0 : i32
    return %c0_i32, %c0_i32_0 : i32, i32
  }
  func.func @transform_4(%arg0: i32) -> (i32, i32) {
    %c0_i32 = arith.constant 0 : i32
    %c0_i32_0 = arith.constant 0 : i32
    %c0_i32_1 = arith.constant 0 : i32
    return %c0_i32, %c0_i32_0 : i32, i32
  }
  func.func @transform_5(%arg0: i32) -> (i32, i32) {
    %c0_i32 = arith.constant 0 : i32
    %c0_i32_0 = arith.constant 0 : i32
    return %arg0, %c0_i32 : i32, i32
  }
  func.func @transform_6(%arg0: i32) -> (i32, i32) {
    %c0_i32 = arith.constant 0 : i32
    %c0_i32_0 = arith.constant 0 : i32
    return %arg0, %c0_i32 : i32, i32
  }
}

</mosaic_0001>

<llo_original>
// kernel: _lambda_.3
$region0: #{_lambda_.3}
  #allocation0 [shape = 'u32[]', space=smem, size = 0x4, offset = 0x4, fixed_abs, tag = 'smem constant byte address 0x4 - core index']
  #allocation1 [shape = 'u32[144,128]{1,0:T(1,128)}', space=vmem, size = 0x12000, scoped, tag = 'internal scratch']
  #allocation2 [shape = 'f32[1]{0:T(128)S(6)}', space=smem, size = 0x200, scoped, tag = 'scoped memory for _lambda_.3']
  %s0 = inlined_call_operand.<no memory space> [shape: f32[1], index: 0, kind: input, shape index: {}]
  %s1 = inlined_call_operand.vmem [shape: bf16[128,128], index: 1, kind: input, shape index: {}]
  %s2 = inlined_call_operand.vmem [shape: bf16[128,128], index: 2, kind: input, shape index: {}]
  %s3 = inlined_call_operand.vmem [shape: bf16[128,128], index: 3, kind: input, shape index: {}]
  %s4 = inlined_call_operand.vmem [shape: f32[1,128], index: 4, kind: input, shape index: {}]
  %s5 = inlined_call_operand.vmem [shape: f32[128,1], index: 5, kind: input, shape index: {}]
  %s6 = inlined_call_operand.vmem [shape: f32[128,128], index: 6, kind: output, shape index: {}]
  %s7 = sld [smem:[#allocation0]]
  $region34: #{_lambda_.3} parent=0
    _
  %s9 = ssub.s32 1, %s7
  %s10 = scalar_select 0, %s9, %s7
  %11 = sst [smem:[#allocation2]] %s0
  // Predicated region
  $region2: #{_lambda_.3} parent=0 // pred_check
    _
  $region3: #{_lambda_.3} parent=0 // pred_check_branch
    %13 = sbr.rel (0) target = $region5
  $region4: #{_lambda_.3} parent=0 // pred_region
    _
  $region5: #{_lambda_.3} parent=0 // pred_fallthru
    _
  // Predicated region
  $region6: #{_lambda_.3} parent=0 // pred_check
    _
  $region7: #{_lambda_.3} parent=0 // pred_check_branch
    %15 = sbr.rel (0) target = $region9
  $region8: #{_lambda_.3} parent=0 // pred_region
    _
  $region9: #{_lambda_.3} parent=0 // pred_fallthru
    _
  // Predicated region
  $region10: #{_lambda_.3} parent=0 // pred_check
    _
  $region11: #{_lambda_.3} parent=0 // pred_check_branch
    %17 = sbr.rel (0) target = $region13
  $region12: #{_lambda_.3} parent=0 // pred_region
    _
  $region13: #{_lambda_.3} parent=0 // pred_fallthru
    _
  // Predicated region
  $region14: #{_lambda_.3} parent=0 // pred_check
    _
  $region15: #{_lambda_.3} parent=0 // pred_check_branch
    %19 = sbr.rel (0) target = $region17
  $region16: #{_lambda_.3} parent=0 // pred_region
    _
  $region17: #{_lambda_.3} parent=0 // pred_fallthru
    _
  // Predicated region
  $region18: #{_lambda_.3} parent=0 // pred_check
    _
  $region19: #{_lambda_.3} parent=0 // pred_check_branch
    %21 = sbr.rel (0) target = $region21
  $region20: #{_lambda_.3} parent=0 // pred_region
    _
  $region21: #{_lambda_.3} parent=0 // pred_fallthru
    _
  // Predicated region
  $region22: #{_lambda_.3} parent=0 // pred_check
    _
  $region23: #{_lambda_.3} parent=0 // pred_check_branch
    %23 = sbr.rel (0) target = $region25
  $region24: #{_lambda_.3} parent=0 // pred_region
    _
  $region25: #{_lambda_.3} parent=0 // pred_fallthru
    _
  %s25 = sld [smem:[#allocation2]]
  %v26 = vld [vmem:[%s2] sm:$0xf]
  %v27 = vld [vmem:[%s2 + $0x4] sm:$0xf]
  %v28 = vld [vmem:[%s2 + $0x8] sm:$0xf]
  %v29 = vld [vmem:[%s2 + $0xc] sm:$0xf]
  %v30 = vld [vmem:[%s2 + $0x10] sm:$0xf]
  %v31 = vld [vmem:[%s2 + $0x14] sm:$0xf]
  %v32 = vld [vmem:[%s2 + $0x18] sm:$0xf]
  %v33 = vld [vmem:[%s2 + $0x1c] sm:$0xf]
  %v34 = vld [vmem:[%s2 + $0x20] sm:$0xf]
  %v35 = vld [vmem:[%s2 + $0x24] sm:$0xf]
  %v36 = vld [vmem:[%s2 + $0x28] sm:$0xf]
  %v37 = vld [vmem:[%s2 + $0x2c] sm:$0xf]
  %v38 = vld [vmem:[%s2 + $0x30] sm:$0xf]
  %v39 = vld [vmem:[%s2 + $0x34] sm:$0xf]
  %v40 = vld [vmem:[%s2 + $0x38] sm:$0xf]
  %v41 = vld [vmem:[%s2 + $0x3c] sm:$0xf]
  %v42 = vld [vmem:[%s1] sm:$0xf]
  %v43 = vld [vmem:[%s1 + $0x4] sm:$0xf]
  %v44 = vld [vmem:[%s1 + $0x8] sm:$0xf]
  %v45 = vld [vmem:[%s1 + $0xc] sm:$0xf]
  %v46 = vld [vmem:[%s1 + $0x10] sm:$0xf]
  %v47 = vld [vmem:[%s1 + $0x14] sm:$0xf]
  %v48 = vld [vmem:[%s1 + $0x18] sm:$0xf]
  %v49 = vld [vmem:[%s1 + $0x1c] sm:$0xf]
  %v50 = vld [vmem:[%s1 + $0x20] sm:$0xf]
  %v51 = vld [vmem:[%s1 + $0x24] sm:$0xf]
  %v52 = vld [vmem:[%s1 + $0x28] sm:$0xf]
  %v53 = vld [vmem:[%s1 + $0x2c] sm:$0xf]
  %v54 = vld [vmem:[%s1 + $0x30] sm:$0xf]
  %v55 = vld [vmem:[%s1 + $0x34] sm:$0xf]
  %v56 = vld [vmem:[%s1 + $0x38] sm:$0xf]
  %v57 = vld [vmem:[%s1 + $0x3c] sm:$0xf]
  %s58 = smul.u32 0, 128
  %s59 = sshra.s32 %s58, 3
  %s60 = sand.u32 %s58, 7
  %s61 = smul.addr %s59, 4
  %s62 = scalar_lea.vmem %s2, %s61
  %v63 = vld [vmem:[%s62] sm:$0xf]
  %v64 = vld [vmem:[%s62 + $0x4] sm:$0xf]
  %v65 = vld [vmem:[%s62 + $0x8] sm:$0xf]
  %v66 = vld [vmem:[%s62 + $0xc] sm:$0xf]
  %v67 = vld [vmem:[%s62 + $0x10] sm:$0xf]
  %v68 = vld [vmem:[%s62 + $0x14] sm:$0xf]
  %v69 = vld [vmem:[%s62 + $0x18] sm:$0xf]
  %v70 = vld [vmem:[%s62 + $0x1c] sm:$0xf]
  %v71 = vld [vmem:[%s62 + $0x20] sm:$0xf]
  %v72 = vld [vmem:[%s62 + $0x24] sm:$0xf]
  %v73 = vld [vmem:[%s62 + $0x28] sm:$0xf]
  %v74 = vld [vmem:[%s62 + $0x2c] sm:$0xf]
  %v75 = vld [vmem:[%s62 + $0x30] sm:$0xf]
  %v76 = vld [vmem:[%s62 + $0x34] sm:$0xf]
  %v77 = vld [vmem:[%s62 + $0x38] sm:$0xf]
  %v78 = vld [vmem:[%s62 + $0x3c] sm:$0xf]
  %v79 = vunpack.c.l.bf16 %v63
  %v80 = vunpack.c.l.bf16 %v64
  %v81 = vunpack.c.l.bf16 %v65
  %v82 = vunpack.c.l.bf16 %v66
  %v83 = vunpack.c.l.bf16 %v67
  %v84 = vunpack.c.l.bf16 %v68
  %v85 = vunpack.c.l.bf16 %v69
  %v86 = vunpack.c.l.bf16 %v70
  %v87 = vunpack.c.l.bf16 %v71
  %v88 = vunpack.c.l.bf16 %v72
  %v89 = vunpack.c.l.bf16 %v73
  %v90 = vunpack.c.l.bf16 %v74
  %v91 = vunpack.c.l.bf16 %v75
  %v92 = vunpack.c.l.bf16 %v76
  %v93 = vunpack.c.l.bf16 %v77
  %v94 = vunpack.c.l.bf16 %v78
  %v95 = vstv %s25
  %v96 = vmul.f32 %v95, %v79
  %v97 = vmul.f32 %v95, %v80
  %v98 = vmul.f32 %v95, %v81
  %v99 = vmul.f32 %v95, %v82
  %v100 = vmul.f32 %v95, %v83
  %v101 = vmul.f32 %v95, %v84
  %v102 = vmul.f32 %v95, %v85
  %v103 = vmul.f32 %v95, %v86
  %v104 = vmul.f32 %v95, %v87
  %v105 = vmul.f32 %v95, %v88
  %v106 = vmul.f32 %v95, %v89
  %v107 = vmul.f32 %v95, %v90
  %v108 = vmul.f32 %v95, %v91
  %v109 = vmul.f32 %v95, %v92
  %v110 = vmul.f32 %v95, %v93
  %v111 = vmul.f32 %v95, %v94
  %v128 = vunpack.c.l.b16 %v42
  %v129 = vunpack.c.l.b16 %v43
  %v130 = vunpack.c.l.b16 %v44
  %v131 = vunpack.c.l.b16 %v45
  %v132 = vunpack.c.l.b16 %v46
  %v133 = vunpack.c.l.b16 %v47
  %v134 = vunpack.c.l.b16 %v48
  %v135 = vunpack.c.l.b16 %v49
  %v136 = vunpack.c.l.b16 %v50
  %v137 = vunpack.c.l.b16 %v51
  %v138 = vunpack.c.l.b16 %v52
  %v139 = vunpack.c.l.b16 %v53
  %v140 = vunpack.c.l.b16 %v54
  %v141 = vunpack.c.l.b16 %v55
  %v142 = vunpack.c.l.b16 %v56
  %v143 = vunpack.c.l.b16 %v57
  %v144 = vpack.c.b16 %v129, %v128
  %v145 = vpack.c.b16 %v131, %v130
  %v146 = vpack.c.b16 %v133, %v132
  %v147 = vpack.c.b16 %v135, %v134
  %v148 = vpack.c.b16 %v137, %v136
  %v149 = vpack.c.b16 %v139, %v138
  %v150 = vpack.c.b16 %v141, %v140
  %v151 = vpack.c.b16 %v143, %v142
  %v176 = vunpack.c.l.b16 %v26
  %v177 = vunpack.c.l.b16 %v27
  %v178 = vunpack.c.l.b16 %v28
  %v179 = vunpack.c.l.b16 %v29
  %v180 = vunpack.c.l.b16 %v30
  %v181 = vunpack.c.l.b16 %v31
  %v182 = vunpack.c.l.b16 %v32
  %v183 = vunpack.c.l.b16 %v33
  %v184 = vunpack.c.l.b16 %v34
  %v185 = vunpack.c.l.b16 %v35
  %v186 = vunpack.c.l.b16 %v36
  %v187 = vunpack.c.l.b16 %v37
  %v188 = vunpack.c.l.b16 %v38
  %v189 = vunpack.c.l.b16 %v39
  %v190 = vunpack.c.l.b16 %v40
  %v191 = vunpack.c.l.b16 %v41
  %v192 = vpack.c.b16 %v177, %v176
  %v193 = vpack.c.b16 %v179, %v178
  %v194 = vpack.c.b16 %v181, %v180
  %v195 = vpack.c.b16 %v183, %v182
  %v196 = vpack.c.b16 %v185, %v184
  %v197 = vpack.c.b16 %v187, %v186
  %v198 = vpack.c.b16 %v189, %v188
  %v199 = vpack.c.b16 %v191, %v190
  %208 = vmatprep.subr.bf16.mxu0 0
  %209 = vmatpush1.bf16.msra.mxu0 %v199
  %210 = vmatprep.subr.bf16.mxu0 0
  %211 = vmatpush1.bf16.msra.mxu0 %v198
  %212 = vmatprep.subr.bf16.mxu0 0
  %213 = vmatpush1.bf16.msra.mxu0 %v197
  %214 = vmatprep.subr.bf16.mxu0 0
  %215 = vmatpush1.bf16.msra.mxu0 %v196
  %216 = vmatprep.subr.bf16.mxu0 0
  %217 = vmatpush1.bf16.msra.mxu0 %v195
  %218 = vmatprep.subr.bf16.mxu0 0
  %219 = vmatpush1.bf16.msra.mxu0 %v194
  %220 = vmatprep.subr.bf16.mxu0 0
  %221 = vmatpush1.bf16.msra.mxu0 %v193
  %222 = vmatprep.subr.bf16.mxu0 0
  %223 = vmatpush1.bf16.msra.mxu0 %v192
  %224 = vmatprep.subr.bf16.mxu0 0
  %225 = vmatpush2.bf16.msra.mxu0 0
  %226 = vmatprep.subr.bf16.mxu0 0
  %227 = vmatpush2.bf16.msra.mxu0 0
  %228 = vmatprep.subr.bf16.mxu0 0
  %229 = vmatpush2.bf16.msra.mxu0 0
  %230 = vmatprep.subr.bf16.mxu0 0
  %231 = vmatpush2.bf16.msra.mxu0 0
  %232 = vmatprep.subr.bf16.mxu0 0
  %233 = vmatpush2.bf16.msra.mxu0 0
  %234 = vmatprep.subr.bf16.mxu0 0
  %235 = vmatpush2.bf16.msra.mxu0 0
  %236 = vmatprep.subr.bf16.mxu0 0
  %237 = vmatpush2.bf16.msra.mxu0 0
  %238 = vmatprep.subr.bf16.mxu0 0
  %239 = vmatpush2.bf16.msra.mxu0 0
  %240 = vmatprep.mubr.bf16.mxu0 0
  %241 = vmatmul.mubr.bf16.gmra.mxu0 %v144
  %v242 = vpop.f32.mrf.mxu0
  %v243 = vadd.f32 %v96, %v242
  %v244 = vpop.f32.mrf.mxu0
  %v245 = vpop.f32.mrf.mxu0
  %v246 = vadd.f32 %v97, %v245
  %v247 = vpop.f32.mrf.mxu0
  %248 = vmatprep.mubr.bf16.mxu0 0
  %249 = vmatmul.mubr.bf16.gmra.mxu0 %v145
  %v250 = vpop.f32.mrf.mxu0
  %v251 = vadd.f32 %v98, %v250
  %v252 = vpop.f32.mrf.mxu0
  %v253 = vpop.f32.mrf.mxu0
  %v254 = vadd.f32 %v99, %v253
  %v255 = vpop.f32.mrf.mxu0
  %256 = vmatprep.mubr.bf16.mxu0 0
  %257 = vmatmul.mubr.bf16.gmra.mxu0 %v146
  %v258 = vpop.f32.mrf.mxu0
  %v259 = vadd.f32 %v100, %v258
  %v260 = vpop.f32.mrf.mxu0
  %v261 = vpop.f32.mrf.mxu0
  %v262 = vadd.f32 %v101, %v261
  %v263 = vpop.f32.mrf.mxu0
  %264 = vmatprep.mubr.bf16.mxu0 0
  %265 = vmatmul.mubr.bf16.gmra.mxu0 %v147
  %v266 = vpop.f32.mrf.mxu0
  %v267 = vadd.f32 %v102, %v266
  %v268 = vpop.f32.mrf.mxu0
  %v269 = vpop.f32.mrf.mxu0
  %v270 = vadd.f32 %v103, %v269
  %v271 = vpop.f32.mrf.mxu0
  %272 = vmatprep.mubr.bf16.mxu0 0
  %273 = vmatmul.mubr.bf16.gmra.mxu0 %v148
  %v274 = vpop.f32.mrf.mxu0
  %v275 = vadd.f32 %v104, %v274
  %v276 = vpop.f32.mrf.mxu0
  %v277 = vpop.f32.mrf.mxu0
  %v278 = vadd.f32 %v105, %v277
  %v279 = vpop.f32.mrf.mxu0
  %280 = vmatprep.mubr.bf16.mxu0 0
  %281 = vmatmul.mubr.bf16.gmra.mxu0 %v149
  %v282 = vpop.f32.mrf.mxu0
  %v283 = vadd.f32 %v106, %v282
  %v284 = vpop.f32.mrf.mxu0
  %v285 = vpop.f32.mrf.mxu0
  %v286 = vadd.f32 %v107, %v285
  %v287 = vpop.f32.mrf.mxu0
  %288 = vmatprep.mubr.bf16.mxu0 0
  %289 = vmatmul.mubr.bf16.gmra.mxu0 %v150
  %v290 = vpop.f32.mrf.mxu0
  %v291 = vadd.f32 %v108, %v290
  %v292 = vpop.f32.mrf.mxu0
  %v293 = vpop.f32.mrf.mxu0
  %v294 = vadd.f32 %v109, %v293
  %v295 = vpop.f32.mrf.mxu0
  %296 = vmatprep.mubr.bf16.mxu0 0
  %297 = vmatmul.mubr.bf16.gmra.mxu0 %v151
  %v298 = vpop.f32.mrf.mxu0
  %v299 = vadd.f32 %v110, %v298
  %v300 = vpop.f32.mrf.mxu0
  %v301 = vpop.f32.mrf.mxu0
  %v302 = vadd.f32 %v111, %v301
  %v303 = vpop.f32.mrf.mxu0
  %304 = vdwg.mxu0
  %v305 = vpack.c.bf16 %v246, %v243
  %v306 = vpack.c.bf16 %v254, %v251
  %v307 = vpack.c.bf16 %v262, %v259
  %v308 = vpack.c.bf16 %v270, %v267
  %v309 = vpack.c.bf16 %v278, %v275
  %v310 = vpack.c.bf16 %v286, %v283
  %v311 = vpack.c.bf16 %v294, %v291
  %v312 = vpack.c.bf16 %v302, %v299
  %v313 = vld [vmem:[%s3] sm:$0xf]
  %v314 = vld [vmem:[%s3 + $0x4] sm:$0xf]
  %v315 = vld [vmem:[%s3 + $0x8] sm:$0xf]
  %v316 = vld [vmem:[%s3 + $0xc] sm:$0xf]
  %v317 = vld [vmem:[%s3 + $0x10] sm:$0xf]
  %v318 = vld [vmem:[%s3 + $0x14] sm:$0xf]
  %v319 = vld [vmem:[%s3 + $0x18] sm:$0xf]
  %v320 = vld [vmem:[%s3 + $0x1c] sm:$0xf]
  %v321 = vld [vmem:[%s3 + $0x20] sm:$0xf]
  %v322 = vld [vmem:[%s3 + $0x24] sm:$0xf]
  %v323 = vld [vmem:[%s3 + $0x28] sm:$0xf]
  %v324 = vld [vmem:[%s3 + $0x2c] sm:$0xf]
  %v325 = vld [vmem:[%s3 + $0x30] sm:$0xf]
  %v326 = vld [vmem:[%s3 + $0x34] sm:$0xf]
  %v327 = vld [vmem:[%s3 + $0x38] sm:$0xf]
  %v328 = vld [vmem:[%s3 + $0x3c] sm:$0xf]
  %v329 = vld [vmem:[%s4] sm:$0x1]
  %v331 = vlaneseq
  %v332 = vshrl.u32 %v331, 7
  %v333 = vsub.s32 0, %v332
  %v334 = vrot.slane %v329, %v333
  %v352 = vunpack.c.l.b16 %v313
  %v353 = vunpack.c.l.b16 %v314
  %v354 = vunpack.c.l.b16 %v315
  %v355 = vunpack.c.l.b16 %v316
  %v356 = vunpack.c.l.b16 %v317
  %v357 = vunpack.c.l.b16 %v318
  %v358 = vunpack.c.l.b16 %v319
  %v359 = vunpack.c.l.b16 %v320
  %v360 = vunpack.c.l.b16 %v321
  %v361 = vunpack.c.l.b16 %v322
  %v362 = vunpack.c.l.b16 %v323
  %v363 = vunpack.c.l.b16 %v324
  %v364 = vunpack.c.l.b16 %v325
  %v365 = vunpack.c.l.b16 %v326
  %v366 = vunpack.c.l.b16 %v327
  %v367 = vunpack.c.l.b16 %v328
  %v368 = vpack.c.b16 %v353, %v352
  %v369 = vpack.c.b16 %v355, %v354
  %v370 = vpack.c.b16 %v357, %v356
  %v371 = vpack.c.b16 %v359, %v358
  %v372 = vpack.c.b16 %v361, %v360
  %v373 = vpack.c.b16 %v363, %v362
  %v374 = vpack.c.b16 %v365, %v364
  %v375 = vpack.c.b16 %v367, %v366
  %384 = vmatprep.subr.bf16.mxu0 0
  %385 = vmatpush1.bf16.msra.mxu0 %v375
  %386 = vmatprep.subr.bf16.mxu0 0
  %387 = vmatpush1.bf16.msra.mxu0 %v374
  %388 = vmatprep.subr.bf16.mxu0 0
  %389 = vmatpush1.bf16.msra.mxu0 %v373
  %390 = vmatprep.subr.bf16.mxu0 0
  %391 = vmatpush1.bf16.msra.mxu0 %v372
  %392 = vmatprep.subr.bf16.mxu0 0
  %393 = vmatpush1.bf16.msra.mxu0 %v371
  %394 = vmatprep.subr.bf16.mxu0 0
  %395 = vmatpush1.bf16.msra.mxu0 %v370
  %396 = vmatprep.subr.bf16.mxu0 0
  %397 = vmatpush1.bf16.msra.mxu0 %v369
  %398 = vmatprep.subr.bf16.mxu0 0
  %399 = vmatpush1.bf16.msra.mxu0 %v368
  %400 = vmatprep.subr.bf16.mxu0 0
  %401 = vmatpush2.bf16.msra.mxu0 0
  %402 = vmatprep.subr.bf16.mxu0 0
  %403 = vmatpush2.bf16.msra.mxu0 0
  %404 = vmatprep.subr.bf16.mxu0 0
  %405 = vmatpush2.bf16.msra.mxu0 0
  %406 = vmatprep.subr.bf16.mxu0 0
  %407 = vmatpush2.bf16.msra.mxu0 0
  %408 = vmatprep.subr.bf16.mxu0 0
  %409 = vmatpush2.bf16.msra.mxu0 0
  %410 = vmatprep.subr.bf16.mxu0 0
  %411 = vmatpush2.bf16.msra.mxu0 0
  %412 = vmatprep.subr.bf16.mxu0 0
  %413 = vmatpush2.bf16.msra.mxu0 0
  %414 = vmatprep.subr.bf16.mxu0 0
  %415 = vmatpush2.bf16.msra.mxu0 0
  %416 = vmatprep.mubr.bf16.mxu0 0
  %417 = vmatmul.mubr.bf16.gmra.mxu0 %v305
  %v418 = vpop.f32.mrf.mxu0
  %v419 = vadd.f32 %v334, %v418
  %v420 = vpop.f32.mrf.mxu0
  %v421 = vpop.f32.mrf.mxu0
  %v422 = vadd.f32 %v334, %v421
  %v423 = vpop.f32.mrf.mxu0
  %424 = vmatprep.mubr.bf16.mxu0 0
  %425 = vmatmul.mubr.bf16.gmra.mxu0 %v306
  %v426 = vpop.f32.mrf.mxu0
  %v427 = vadd.f32 %v334, %v426
  %v428 = vpop.f32.mrf.mxu0
  %v429 = vpop.f32.mrf.mxu0
  %v430 = vadd.f32 %v334, %v429
  %v431 = vpop.f32.mrf.mxu0
  %432 = vmatprep.mubr.bf16.mxu0 0
  %433 = vmatmul.mubr.bf16.gmra.mxu0 %v307
  %v434 = vpop.f32.mrf.mxu0
  %v435 = vadd.f32 %v334, %v434
  %v436 = vpop.f32.mrf.mxu0
  %v437 = vpop.f32.mrf.mxu0
  %v438 = vadd.f32 %v334, %v437
  %v439 = vpop.f32.mrf.mxu0
  %440 = vmatprep.mubr.bf16.mxu0 0
  %441 = vmatmul.mubr.bf16.gmra.mxu0 %v308
  %v442 = vpop.f32.mrf.mxu0
  %v443 = vadd.f32 %v334, %v442
  %v444 = vpop.f32.mrf.mxu0
  %v445 = vpop.f32.mrf.mxu0
  %v446 = vadd.f32 %v334, %v445
  %v447 = vpop.f32.mrf.mxu0
  %448 = vmatprep.mubr.bf16.mxu0 0
  %449 = vmatmul.mubr.bf16.gmra.mxu0 %v309
  %v450 = vpop.f32.mrf.mxu0
  %v451 = vadd.f32 %v334, %v450
  %v452 = vpop.f32.mrf.mxu0
  %v453 = vpop.f32.mrf.mxu0
  %v454 = vadd.f32 %v334, %v453
  %v455 = vpop.f32.mrf.mxu0
  %456 = vmatprep.mubr.bf16.mxu0 0
  %457 = vmatmul.mubr.bf16.gmra.mxu0 %v310
  %v458 = vpop.f32.mrf.mxu0
  %v459 = vadd.f32 %v334, %v458
  %v460 = vpop.f32.mrf.mxu0
  %v461 = vpop.f32.mrf.mxu0
  %v462 = vadd.f32 %v334, %v461
  %v463 = vpop.f32.mrf.mxu0
  %464 = vmatprep.mubr.bf16.mxu0 0
  %465 = vmatmul.mubr.bf16.gmra.mxu0 %v311
  %v466 = vpop.f32.mrf.mxu0
  %v467 = vadd.f32 %v334, %v466
  %v468 = vpop.f32.mrf.mxu0
  %v469 = vpop.f32.mrf.mxu0
  %v470 = vadd.f32 %v334, %v469
  %v471 = vpop.f32.mrf.mxu0
  %472 = vmatprep.mubr.bf16.mxu0 0
  %473 = vmatmul.mubr.bf16.gmra.mxu0 %v312
  %v474 = vpop.f32.mrf.mxu0
  %v475 = vadd.f32 %v334, %v474
  %v476 = vpop.f32.mrf.mxu0
  %v477 = vpop.f32.mrf.mxu0
  %v478 = vadd.f32 %v334, %v477
  %v479 = vpop.f32.mrf.mxu0
  %480 = vdwg.mxu0
  %v481 = vmax.f32 %v419, 0.0
  %v482 = vmax.f32 %v422, 0.0
  %v483 = vmax.f32 %v427, 0.0
  %v484 = vmax.f32 %v430, 0.0
  %v485 = vmax.f32 %v435, 0.0
  %v486 = vmax.f32 %v438, 0.0
  %v487 = vmax.f32 %v443, 0.0
  %v488 = vmax.f32 %v446, 0.0
  %v489 = vmax.f32 %v451, 0.0
  %v490 = vmax.f32 %v454, 0.0
  %v491 = vmax.f32 %v459, 0.0
  %v492 = vmax.f32 %v462, 0.0
  %v493 = vmax.f32 %v467, 0.0
  %v494 = vmax.f32 %v470, 0.0
  %v495 = vmax.f32 %v475, 0.0
  %v496 = vmax.f32 %v478, 0.0
  %v497 = vld [vmem:[%s5] sm:$0xff]
  %v498 = vld [vmem:[%s5 + $0x8] sm:$0xff]
  %v499 = vld [vmem:[%s5 + $0x10] sm:$0xff]
  %v500 = vld [vmem:[%s5 + $0x18] sm:$0xff]
  %v501 = vld [vmem:[%s5 + $0x20] sm:$0xff]
  %v502 = vld [vmem:[%s5 + $0x28] sm:$0xff]
  %v503 = vld [vmem:[%s5 + $0x30] sm:$0xff]
  %v504 = vld [vmem:[%s5 + $0x38] sm:$0xff]
  %v505 = vld [vmem:[%s5 + $0x40] sm:$0xff]
  %v506 = vld [vmem:[%s5 + $0x48] sm:$0xff]
  %v507 = vld [vmem:[%s5 + $0x50] sm:$0xff]
  %v508 = vld [vmem:[%s5 + $0x58] sm:$0xff]
  %v509 = vld [vmem:[%s5 + $0x60] sm:$0xff]
  %v510 = vld [vmem:[%s5 + $0x68] sm:$0xff]
  %v511 = vld [vmem:[%s5 + $0x70] sm:$0xff]
  %v512 = vld [vmem:[%s5 + $0x78] sm:$0xff]
  %514 = vset.pattern.permute.xlu0 0
  %515 = vperm.xlu0 %514, %v497
  %v516 = vpop.permute.xlu0 %515
  %519 = vset.pattern.permute.xlu0 0
  %520 = vperm.xlu0 %519, %v498
  %v521 = vpop.permute.xlu0 %520
  %524 = vset.pattern.permute.xlu0 0
  %525 = vperm.xlu0 %524, %v499
  %v526 = vpop.permute.xlu0 %525
  %529 = vset.pattern.permute.xlu0 0
  %530 = vperm.xlu0 %529, %v500
  %v531 = vpop.permute.xlu0 %530
  %534 = vset.pattern.permute.xlu0 0
  %535 = vperm.xlu0 %534, %v501
  %v536 = vpop.permute.xlu0 %535
  %539 = vset.pattern.permute.xlu0 0
  %540 = vperm.xlu0 %539, %v502
  %v541 = vpop.permute.xlu0 %540
  %544 = vset.pattern.permute.xlu0 0
  %545 = vperm.xlu0 %544, %v503
  %v546 = vpop.permute.xlu0 %545
  %549 = vset.pattern.permute.xlu0 0
  %550 = vperm.xlu0 %549, %v504
  %v551 = vpop.permute.xlu0 %550
  %554 = vset.pattern.permute.xlu0 0
  %555 = vperm.xlu0 %554, %v505
  %v556 = vpop.permute.xlu0 %555
  %559 = vset.pattern.permute.xlu0 0
  %560 = vperm.xlu0 %559, %v506
  %v561 = vpop.permute.xlu0 %560
  %564 = vset.pattern.permute.xlu0 0
  %565 = vperm.xlu0 %564, %v507
  %v566 = vpop.permute.xlu0 %565
  %569 = vset.pattern.permute.xlu0 0
  %570 = vperm.xlu0 %569, %v508
  %v571 = vpop.permute.xlu0 %570
  %574 = vset.pattern.permute.xlu0 0
  %575 = vperm.xlu0 %574, %v509
  %v576 = vpop.permute.xlu0 %575
  %579 = vset.pattern.permute.xlu0 0
  %580 = vperm.xlu0 %579, %v510
  %v581 = vpop.permute.xlu0 %580
  %584 = vset.pattern.permute.xlu0 0
  %585 = vperm.xlu0 %584, %v511
  %v586 = vpop.permute.xlu0 %585
  %589 = vset.pattern.permute.xlu0 0
  %590 = vperm.xlu0 %589, %v512
  %v591 = vpop.permute.xlu0 %590
  %v593 = vmul.f32 %v481, %v516
  %v594 = vmul.f32 %v482, %v521
  %v595 = vmul.f32 %v483, %v526
  %v596 = vmul.f32 %v484, %v531
  %v597 = vmul.f32 %v485, %v536
  %v598 = vmul.f32 %v486, %v541
  %v599 = vmul.f32 %v487, %v546
  %v600 = vmul.f32 %v488, %v551
  %v601 = vmul.f32 %v489, %v556
  %v602 = vmul.f32 %v490, %v561
  %v603 = vmul.f32 %v491, %v566
  %v604 = vmul.f32 %v492, %v571
  %v605 = vmul.f32 %v493, %v576
  %v606 = vmul.f32 %v494, %v581
  %v607 = vmul.f32 %v495, %v586
  %v608 = vmul.f32 %v496, %v591
  %609 = vst [vmem:[%s6] sm:$0xff] %v593
  %610 = vst [vmem:[%s6 + $0x8] sm:$0xff] %v594
  %611 = vst [vmem:[%s6 + $0x10] sm:$0xff] %v595
  %612 = vst [vmem:[%s6 + $0x18] sm:$0xff] %v596
  %613 = vst [vmem:[%s6 + $0x20] sm:$0xff] %v597
  %614 = vst [vmem:[%s6 + $0x28] sm:$0xff] %v598
  %615 = vst [vmem:[%s6 + $0x30] sm:$0xff] %v599
  %616 = vst [vmem:[%s6 + $0x38] sm:$0xff] %v600
  %617 = vst [vmem:[%s6 + $0x40] sm:$0xff] %v601
  %618 = vst [vmem:[%s6 + $0x48] sm:$0xff] %v602
  %619 = vst [vmem:[%s6 + $0x50] sm:$0xff] %v603
  %620 = vst [vmem:[%s6 + $0x58] sm:$0xff] %v604
  %621 = vst [vmem:[%s6 + $0x60] sm:$0xff] %v605
  %622 = vst [vmem:[%s6 + $0x68] sm:$0xff] %v606
  %623 = vst [vmem:[%s6 + $0x70] sm:$0xff] %v607
  %624 = vst [vmem:[%s6 + $0x78] sm:$0xff] %v608
  // Predicated region
  $region26: #{_lambda_.3} parent=0 // pred_check
    _
  $region27: #{_lambda_.3} parent=0 // pred_check_branch
    %626 = sbr.rel (0) target = $region29
  $region28: #{_lambda_.3} parent=0 // pred_region
    _
  $region29: #{_lambda_.3} parent=0 // pred_fallthru
    _
  // Predicated region
  $region30: #{_lambda_.3} parent=0 // pred_check
    _
  $region31: #{_lambda_.3} parent=0 // pred_check_branch
    %628 = sbr.rel (0) target = $region33
  $region32: #{_lambda_.3} parent=0 // pred_region
    _
  $region33: #{_lambda_.3} parent=0 // pred_fallthru
    _

// kernel: _lambda_.2
$region0: #{_lambda_.2}
  #allocation0 [shape = 'u32[]', space=smem, size = 0x4, offset = 0x4, fixed_abs, tag = 'smem constant byte address 0x4 - core index']
  #allocation1 [shape = 'u32[144,128]{1,0:T(1,128)}', space=vmem, size = 0x12000, scoped, tag = 'internal scratch']
  #allocation2 [shape = 'f32[1]{0:T(128)S(6)}', space=smem, size = 0x200, scoped, tag = 'scoped memory for _lambda_.2']
  %s0 = inlined_call_operand.<no memory space> [shape: f32[1], index: 0, kind: input, shape index: {}]
  %s1 = inlined_call_operand.hbm [shape: bf16[128,128], index: 1, kind: input, shape index: {}]
  %s2 = inlined_call_operand.vmem [shape: bf16[128,128], index: 2, kind: input, shape index: {}]
  %s3 = inlined_call_operand.hbm [shape: bf16[128,128], index: 3, kind: input, shape index: {}]
  %s4 = inlined_call_operand.vmem [shape: f32[1,128], index: 4, kind: input, shape index: {}]
  %s5 = inlined_call_operand.vmem [shape: f32[128,1], index: 5, kind: input, shape index: {}]
  %s6 = inlined_call_operand.vmem [shape: bf16[128,128], index: 6, kind: output, shape index: {}]
  %s7 = sld [smem:[#allocation0]]
  $region42: #{_lambda_.2} parent=0
    _
  %s9 = ssub.s32 1, %s7
  %s10 = scalar_select 0, %s9, %s7
  %11 = sst [smem:[#allocation2]] %s0
  $region1: #{_lambda_.2} parent=0
    #allocation3 [shape = 'u8[32768]{0}', space=vmem, size = 0x8000, scoped, tag = 'input window, operand 1, single buffered']
    #allocation4 [shape = 's32[1]{0}', space=sflag, size = 0x4, scoped, tag = 'scoped memory for _lambda_.2']
    #allocation5 [shape = 'u8[32768]{0}', space=vmem, size = 0x8000, scoped, tag = 'input window, operand 3, single buffered']
    #allocation6 [shape = 's32[1]{0}', space=sflag, size = 0x4, scoped, tag = 'scoped memory for _lambda_.2']
    %12 = vsyncpa [#allocation4], 0
    %13 = vsyncpa [#allocation6], 0
    // Predicated region
    $region2: #{_lambda_.2} parent=1 // pred_check
      _
    $region3: #{_lambda_.2} parent=1 // pred_check_branch
      %15 = sbr.rel (0) target = $region5
    $region4: #{_lambda_.2} parent=1 // pred_region
      _
    $region5: #{_lambda_.2} parent=1 // pred_fallthru
      _
    // Predicated region
    $region6: #{_lambda_.2} parent=1 // pred_check
      _
    $region7: #{_lambda_.2} parent=1 // pred_check_branch
      %17 = sbr.rel (0) target = $region9
    $region8: #{_lambda_.2} parent=1 // pred_region
      %s19 = ssub.s32 1024, 1024
      %20 = vsyncadd [#allocation4], %s19
      %s21 = sshll.u32 [#allocation3], 4
      %s22 = int_to_ptr.vmem [resolvable:$true] %s21
      %27 = dma.hbm_to_vmem [thread:$0]  %s1, 1024, %s22, [#allocation4], 64, 64, 4
    $region9: #{_lambda_.2} parent=1 // pred_fallthru
      _
    // Predicated region
    $region10: #{_lambda_.2} parent=1 // pred_check
      _
    $region11: #{_lambda_.2} parent=1 // pred_check_branch
      %29 = sbr.rel (0) target = $region13
    $region12: #{_lambda_.2} parent=1 // pred_region
      _
    $region13: #{_lambda_.2} parent=1 // pred_fallthru
      _
    // Predicated region
    $region14: #{_lambda_.2} parent=1 // pred_check
      _
    $region15: #{_lambda_.2} parent=1 // pred_check_branch
      %31 = sbr.rel (0) target = $region17
    $region16: #{_lambda_.2} parent=1 // pred_region
      %s33 = ssub.s32 1024, 1024
      %34 = vsyncadd [#allocation6], %s33
      %s35 = sshll.u32 [#allocation5], 4
      %s36 = int_to_ptr.vmem [resolvable:$true] %s35
      %41 = dma.hbm_to_vmem [thread:$0]  %s3, 1024, %s36, [#allocation6], 64, 64, 4
    $region17: #{_lambda_.2} parent=1 // pred_fallthru
      _
    // Predicated region
    $region18: #{_lambda_.2} parent=1 // pred_check
      _
    $region19: #{_lambda_.2} parent=1 // pred_check_branch
      %43 = sbr.rel (0) target = $region21
    $region20: #{_lambda_.2} parent=1 // pred_region
      _
    $region21: #{_lambda_.2} parent=1 // pred_fallthru
      _
    // Predicated region
    $region22: #{_lambda_.2} parent=1 // pred_check
      _
    $region23: #{_lambda_.2} parent=1 // pred_check_branch
      %45 = sbr.rel (0) target = $region25
    $region24: #{_lambda_.2} parent=1 // pred_region
      _
    $region25: #{_lambda_.2} parent=1 // pred_fallthru
      _
    // Predicated region
    $region26: #{_lambda_.2} parent=1 // pred_check
      _
    $region27: #{_lambda_.2} parent=1 // pred_check_branch
      %47 = sbr.rel (0) target = $region29
    $region28: #{_lambda_.2} parent=1 // pred_region
      %48 = dma.done [#allocation4], 1024
    $region29: #{_lambda_.2} parent=1 // pred_fallthru
      _
    // Predicated region
    $region30: #{_lambda_.2} parent=1 // pred_check
      _
    $region31: #{_lambda_.2} parent=1 // pred_check_branch
      %50 = sbr.rel (0) target = $region33
    $region32: #{_lambda_.2} parent=1 // pred_region
      %51 = dma.done [#allocation6], 1024
    $region33: #{_lambda_.2} parent=1 // pred_fallthru
      _
    %s53 = sld [smem:[#allocation2]]
    %v54 = vld [vmem:[%s2] sm:$0xf]
    %v55 = vld [vmem:[%s2 + $0x4] sm:$0xf]
    %v56 = vld [vmem:[%s2 + $0x8] sm:$0xf]
    %v57 = vld [vmem:[%s2 + $0xc] sm:$0xf]
    %v58 = vld [vmem:[%s2 + $0x10] sm:$0xf]
    %v59 = vld [vmem:[%s2 + $0x14] sm:$0xf]
    %v60 = vld [vmem:[%s2 + $0x18] sm:$0xf]
    %v61 = vld [vmem:[%s2 + $0x1c] sm:$0xf]
    %v62 = vld [vmem:[%s2 + $0x20] sm:$0xf]
    %v63 = vld [vmem:[%s2 + $0x24] sm:$0xf]
    %v64 = vld [vmem:[%s2 + $0x28] sm:$0xf]
    %v65 = vld [vmem:[%s2 + $0x2c] sm:$0xf]
    %v66 = vld [vmem:[%s2 + $0x30] sm:$0xf]
    %v67 = vld [vmem:[%s2 + $0x34] sm:$0xf]
    %v68 = vld [vmem:[%s2 + $0x38] sm:$0xf]
    %v69 = vld [vmem:[%s2 + $0x3c] sm:$0xf]
    %v70 = vld [vmem:[#allocation3] sm:$0xf]
    %v71 = vld [vmem:[#allocation3 + $0x4] sm:$0xf]
    %v72 = vld [vmem:[#allocation3 + $0x8] sm:$0xf]
    %v73 = vld [vmem:[#allocation3 + $0xc] sm:$0xf]
    %v74 = vld [vmem:[#allocation3 + $0x10] sm:$0xf]
    %v75 = vld [vmem:[#allocation3 + $0x14] sm:$0xf]
    %v76 = vld [vmem:[#allocation3 + $0x18] sm:$0xf]
    %v77 = vld [vmem:[#allocation3 + $0x1c] sm:$0xf]
    %v78 = vld [vmem:[#allocation3 + $0x20] sm:$0xf]
    %v79 = vld [vmem:[#allocation3 + $0x24] sm:$0xf]
    %v80 = vld [vmem:[#allocation3 + $0x28] sm:$0xf]
    %v81 = vld [vmem:[#allocation3 + $0x2c] sm:$0xf]
    %v82 = vld [vmem:[#allocation3 + $0x30] sm:$0xf]
    %v83 = vld [vmem:[#allocation3 + $0x34] sm:$0xf]
    %v84 = vld [vmem:[#allocation3 + $0x38] sm:$0xf]
    %v85 = vld [vmem:[#allocation3 + $0x3c] sm:$0xf]
    %s86 = smul.u32 0, 128
    %s87 = sshra.s32 %s86, 3
    %s88 = sand.u32 %s86, 7
    %s89 = smul.addr %s87, 4
    %s90 = scalar_lea.vmem %s2, %s89
    %v91 = vld [vmem:[%s90] sm:$0xf]
    %v92 = vld [vmem:[%s90 + $0x4] sm:$0xf]
    %v93 = vld [vmem:[%s90 + $0x8] sm:$0xf]
    %v94 = vld [vmem:[%s90 + $0xc] sm:$0xf]
    %v95 = vld [vmem:[%s90 + $0x10] sm:$0xf]
    %v96 = vld [vmem:[%s90 + $0x14] sm:$0xf]
    %v97 = vld [vmem:[%s90 + $0x18] sm:$0xf]
    %v98 = vld [vmem:[%s90 + $0x1c] sm:$0xf]
    %v99 = vld [vmem:[%s90 + $0x20] sm:$0xf]
    %v100 = vld [vmem:[%s90 + $0x24] sm:$0xf]
    %v101 = vld [vmem:[%s90 + $0x28] sm:$0xf]
    %v102 = vld [vmem:[%s90 + $0x2c] sm:$0xf]
    %v103 = vld [vmem:[%s90 + $0x30] sm:$0xf]
    %v104 = vld [vmem:[%s90 + $0x34] sm:$0xf]
    %v105 = vld [vmem:[%s90 + $0x38] sm:$0xf]
    %v106 = vld [vmem:[%s90 + $0x3c] sm:$0xf]
    %v107 = vunpack.c.l.bf16 %v91
    %v108 = vunpack.c.l.bf16 %v92
    %v109 = vunpack.c.l.bf16 %v93
    %v110 = vunpack.c.l.bf16 %v94
    %v111 = vunpack.c.l.bf16 %v95
    %v112 = vunpack.c.l.bf16 %v96
    %v113 = vunpack.c.l.bf16 %v97
    %v114 = vunpack.c.l.bf16 %v98
    %v115 = vunpack.c.l.bf16 %v99
    %v116 = vunpack.c.l.bf16 %v100
    %v117 = vunpack.c.l.bf16 %v101
    %v118 = vunpack.c.l.bf16 %v102
    %v119 = vunpack.c.l.bf16 %v103
    %v120 = vunpack.c.l.bf16 %v104
    %v121 = vunpack.c.l.bf16 %v105
    %v122 = vunpack.c.l.bf16 %v106
    %v123 = vstv %s53
    %v124 = vmul.f32 %v123, %v107
    %v125 = vmul.f32 %v123, %v108
    %v126 = vmul.f32 %v123, %v109
    %v127 = vmul.f32 %v123, %v110
    %v128 = vmul.f32 %v123, %v111
    %v129 = vmul.f32 %v123, %v112
    %v130 = vmul.f32 %v123, %v113
    %v131 = vmul.f32 %v123, %v114
    %v132 = vmul.f32 %v123, %v115
    %v133 = vmul.f32 %v123, %v116
    %v134 = vmul.f32 %v123, %v117
    %v135 = vmul.f32 %v123, %v118
    %v136 = vmul.f32 %v123, %v119
    %v137 = vmul.f32 %v123, %v120
    %v138 = vmul.f32 %v123, %v121
    %v139 = vmul.f32 %v123, %v122
    %v156 = vunpack.c.l.b16 %v70
    %v157 = vunpack.c.l.b16 %v71
    %v158 = vunpack.c.l.b16 %v72
    %v159 = vunpack.c.l.b16 %v73
    %v160 = vunpack.c.l.b16 %v74
    %v161 = vunpack.c.l.b16 %v75
    %v162 = vunpack.c.l.b16 %v76
    %v163 = vunpack.c.l.b16 %v77
    %v164 = vunpack.c.l.b16 %v78
    %v165 = vunpack.c.l.b16 %v79
    %v166 = vunpack.c.l.b16 %v80
    %v167 = vunpack.c.l.b16 %v81
    %v168 = vunpack.c.l.b16 %v82
    %v169 = vunpack.c.l.b16 %v83
    %v170 = vunpack.c.l.b16 %v84
    %v171 = vunpack.c.l.b16 %v85
    %v172 = vpack.c.b16 %v157, %v156
    %v173 = vpack.c.b16 %v159, %v158
    %v174 = vpack.c.b16 %v161, %v160
    %v175 = vpack.c.b16 %v163, %v162
    %v176 = vpack.c.b16 %v165, %v164
    %v177 = vpack.c.b16 %v167, %v166
    %v178 = vpack.c.b16 %v169, %v168
    %v179 = vpack.c.b16 %v171, %v170
    %v204 = vunpack.c.l.b16 %v54
    %v205 = vunpack.c.l.b16 %v55
    %v206 = vunpack.c.l.b16 %v56
    %v207 = vunpack.c.l.b16 %v57
    %v208 = vunpack.c.l.b16 %v58
    %v209 = vunpack.c.l.b16 %v59
    %v210 = vunpack.c.l.b16 %v60
    %v211 = vunpack.c.l.b16 %v61
    %v212 = vunpack.c.l.b16 %v62
    %v213 = vunpack.c.l.b16 %v63
    %v214 = vunpack.c.l.b16 %v64
    %v215 = vunpack.c.l.b16 %v65
    %v216 = vunpack.c.l.b16 %v66
    %v217 = vunpack.c.l.b16 %v67
    %v218 = vunpack.c.l.b16 %v68
    %v219 = vunpack.c.l.b16 %v69
    %v220 = vpack.c.b16 %v205, %v204
    %v221 = vpack.c.b16 %v207, %v206
    %v222 = vpack.c.b16 %v209, %v208
    %v223 = vpack.c.b16 %v211, %v210
    %v224 = vpack.c.b16 %v213, %v212
    %v225 = vpack.c.b16 %v215, %v214
    %v226 = vpack.c.b16 %v217, %v216
    %v227 = vpack.c.b16 %v219, %v218
    %236 = vmatprep.subr.bf16.mxu0 0
    %237 = vmatpush1.bf16.msra.mxu0 %v227
    %238 = vmatprep.subr.bf16.mxu0 0
    %239 = vmatpush1.bf16.msra.mxu0 %v226
    %240 = vmatprep.subr.bf16.mxu0 0
    %241 = vmatpush1.bf16.msra.mxu0 %v225
    %242 = vmatprep.subr.bf16.mxu0 0
    %243 = vmatpush1.bf16.msra.mxu0 %v224
    %244 = vmatprep.subr.bf16.mxu0 0
    %245 = vmatpush1.bf16.msra.mxu0 %v223
    %246 = vmatprep.subr.bf16.mxu0 0
    %247 = vmatpush1.bf16.msra.mxu0 %v222
    %248 = vmatprep.subr.bf16.mxu0 0
    %249 = vmatpush1.bf16.msra.mxu0 %v221
    %250 = vmatprep.subr.bf16.mxu0 0
    %251 = vmatpush1.bf16.msra.mxu0 %v220
    %252 = vmatprep.subr.bf16.mxu0 0
    %253 = vmatpush2.bf16.msra.mxu0 0
    %254 = vmatprep.subr.bf16.mxu0 0
    %255 = vmatpush2.bf16.msra.mxu0 0
    %256 = vmatprep.subr.bf16.mxu0 0
    %257 = vmatpush2.bf16.msra.mxu0 0
    %258 = vmatprep.subr.bf16.mxu0 0
    %259 = vmatpush2.bf16.msra.mxu0 0
    %260 = vmatprep.subr.bf16.mxu0 0
    %261 = vmatpush2.bf16.msra.mxu0 0
    %262 = vmatprep.subr.bf16.mxu0 0
    %263 = vmatpush2.bf16.msra.mxu0 0
    %264 = vmatprep.subr.bf16.mxu0 0
    %265 = vmatpush2.bf16.msra.mxu0 0
    %266 = vmatprep.subr.bf16.mxu0 0
    %267 = vmatpush2.bf16.msra.mxu0 0
    %268 = vmatprep.mubr.bf16.mxu0 0
    %269 = vmatmul.mubr.bf16.gmra.mxu0 %v172
    %v270 = vpop.f32.mrf.mxu0
    %v271 = vadd.f32 %v124, %v270
    %v272 = vpop.f32.mrf.mxu0
    %v273 = vpop.f32.mrf.mxu0
    %v274 = vadd.f32 %v125, %v273
    %v275 = vpop.f32.mrf.mxu0
    %276 = vmatprep.mubr.bf16.mxu0 0
    %277 = vmatmul.mubr.bf16.gmra.mxu0 %v173
    %v278 = vpop.f32.mrf.mxu0
    %v279 = vadd.f32 %v126, %v278
    %v280 = vpop.f32.mrf.mxu0
    %v281 = vpop.f32.mrf.mxu0
    %v282 = vadd.f32 %v127, %v281
    %v283 = vpop.f32.mrf.mxu0
    %284 = vmatprep.mubr.bf16.mxu0 0
    %285 = vmatmul.mubr.bf16.gmra.mxu0 %v174
    %v286 = vpop.f32.mrf.mxu0
    %v287 = vadd.f32 %v128, %v286
    %v288 = vpop.f32.mrf.mxu0
    %v289 = vpop.f32.mrf.mxu0
    %v290 = vadd.f32 %v129, %v289
    %v291 = vpop.f32.mrf.mxu0
    %292 = vmatprep.mubr.bf16.mxu0 0
    %293 = vmatmul.mubr.bf16.gmra.mxu0 %v175
    %v294 = vpop.f32.mrf.mxu0
    %v295 = vadd.f32 %v130, %v294
    %v296 = vpop.f32.mrf.mxu0
    %v297 = vpop.f32.mrf.mxu0
    %v298 = vadd.f32 %v131, %v297
    %v299 = vpop.f32.mrf.mxu0
    %300 = vmatprep.mubr.bf16.mxu0 0
    %301 = vmatmul.mubr.bf16.gmra.mxu0 %v176
    %v302 = vpop.f32.mrf.mxu0
    %v303 = vadd.f32 %v132, %v302
    %v304 = vpop.f32.mrf.mxu0
    %v305 = vpop.f32.mrf.mxu0
    %v306 = vadd.f32 %v133, %v305
    %v307 = vpop.f32.mrf.mxu0
    %308 = vmatprep.mubr.bf16.mxu0 0
    %309 = vmatmul.mubr.bf16.gmra.mxu0 %v177
    %v310 = vpop.f32.mrf.mxu0
    %v311 = vadd.f32 %v134, %v310
    %v312 = vpop.f32.mrf.mxu0
    %v313 = vpop.f32.mrf.mxu0
    %v314 = vadd.f32 %v135, %v313
    %v315 = vpop.f32.mrf.mxu0
    %316 = vmatprep.mubr.bf16.mxu0 0
    %317 = vmatmul.mubr.bf16.gmra.mxu0 %v178
    %v318 = vpop.f32.mrf.mxu0
    %v319 = vadd.f32 %v136, %v318
    %v320 = vpop.f32.mrf.mxu0
    %v321 = vpop.f32.mrf.mxu0
    %v322 = vadd.f32 %v137, %v321
    %v323 = vpop.f32.mrf.mxu0
    %324 = vmatprep.mubr.bf16.mxu0 0
    %325 = vmatmul.mubr.bf16.gmra.mxu0 %v179
    %v326 = vpop.f32.mrf.mxu0
    %v327 = vadd.f32 %v138, %v326
    %v328 = vpop.f32.mrf.mxu0
    %v329 = vpop.f32.mrf.mxu0
    %v330 = vadd.f32 %v139, %v329
    %v331 = vpop.f32.mrf.mxu0
    %332 = vdwg.mxu0
    %v333 = vpack.c.bf16 %v274, %v271
    %v334 = vpack.c.bf16 %v282, %v279
    %v335 = vpack.c.bf16 %v290, %v287
    %v336 = vpack.c.bf16 %v298, %v295
    %v337 = vpack.c.bf16 %v306, %v303
    %v338 = vpack.c.bf16 %v314, %v311
    %v339 = vpack.c.bf16 %v322, %v319
    %v340 = vpack.c.bf16 %v330, %v327
    %v341 = vld [vmem:[#allocation5] sm:$0xf]
    %v342 = vld [vmem:[#allocation5 + $0x4] sm:$0xf]
    %v343 = vld [vmem:[#allocation5 + $0x8] sm:$0xf]
    %v344 = vld [vmem:[#allocation5 + $0xc] sm:$0xf]
    %v345 = vld [vmem:[#allocation5 + $0x10] sm:$0xf]
    %v346 = vld [vmem:[#allocation5 + $0x14] sm:$0xf]
    %v347 = vld [vmem:[#allocation5 + $0x18] sm:$0xf]
    %v348 = vld [vmem:[#allocation5 + $0x1c] sm:$0xf]
    %v349 = vld [vmem:[#allocation5 + $0x20] sm:$0xf]
    %v350 = vld [vmem:[#allocation5 + $0x24] sm:$0xf]
    %v351 = vld [vmem:[#allocation5 + $0x28] sm:$0xf]
    %v352 = vld [vmem:[#allocation5 + $0x2c] sm:$0xf]
    %v353 = vld [vmem:[#allocation5 + $0x30] sm:$0xf]
    %v354 = vld [vmem:[#allocation5 + $0x34] sm:$0xf]
    %v355 = vld [vmem:[#allocation5 + $0x38] sm:$0xf]
    %v356 = vld [vmem:[#allocation5 + $0x3c] sm:$0xf]
    %v357 = vld [vmem:[%s4] sm:$0x1]
    %v359 = vlaneseq
    %v360 = vshrl.u32 %v359, 7
    %v361 = vsub.s32 0, %v360
    %v362 = vrot.slane %v357, %v361
    %v380 = vunpack.c.l.b16 %v341
    %v381 = vunpack.c.l.b16 %v342
    %v382 = vunpack.c.l.b16 %v343
    %v383 = vunpack.c.l.b16 %v344
    %v384 = vunpack.c.l.b16 %v345
    %v385 = vunpack.c.l.b16 %v346
    %v386 = vunpack.c.l.b16 %v347
    %v387 = vunpack.c.l.b16 %v348
    %v388 = vunpack.c.l.b16 %v349
    %v389 = vunpack.c.l.b16 %v350
    %v390 = vunpack.c.l.b16 %v351
    %v391 = vunpack.c.l.b16 %v352
    %v392 = vunpack.c.l.b16 %v353
    %v393 = vunpack.c.l.b16 %v354
    %v394 = vunpack.c.l.b16 %v355
    %v395 = vunpack.c.l.b16 %v356
    %v396 = vpack.c.b16 %v381, %v380
    %v397 = vpack.c.b16 %v383, %v382
    %v398 = vpack.c.b16 %v385, %v384
    %v399 = vpack.c.b16 %v387, %v386
    %v400 = vpack.c.b16 %v389, %v388
    %v401 = vpack.c.b16 %v391, %v390
    %v402 = vpack.c.b16 %v393, %v392
    %v403 = vpack.c.b16 %v395, %v394
    %412 = vmatprep.subr.bf16.mxu0 0
    %413 = vmatpush1.bf16.msra.mxu0 %v403
    %414 = vmatprep.subr.bf16.mxu0 0
    %415 = vmatpush1.bf16.msra.mxu0 %v402
    %416 = vmatprep.subr.bf16.mxu0 0
    %417 = vmatpush1.bf16.msra.mxu0 %v401
    %418 = vmatprep.subr.bf16.mxu0 0
    %419 = vmatpush1.bf16.msra.mxu0 %v400
    %420 = vmatprep.subr.bf16.mxu0 0
    %421 = vmatpush1.bf16.msra.mxu0 %v399
    %422 = vmatprep.subr.bf16.mxu0 0
    %423 = vmatpush1.bf16.msra.mxu0 %v398
    %424 = vmatprep.subr.bf16.mxu0 0
    %425 = vmatpush1.bf16.msra.mxu0 %v397
    %426 = vmatprep.subr.bf16.mxu0 0
    %427 = vmatpush1.bf16.msra.mxu0 %v396
    %428 = vmatprep.subr.bf16.mxu0 0
    %429 = vmatpush2.bf16.msra.mxu0 0
    %430 = vmatprep.subr.bf16.mxu0 0
    %431 = vmatpush2.bf16.msra.mxu0 0
    %432 = vmatprep.subr.bf16.mxu0 0
    %433 = vmatpush2.bf16.msra.mxu0 0
    %434 = vmatprep.subr.bf16.mxu0 0
    %435 = vmatpush2.bf16.msra.mxu0 0
    %436 = vmatprep.subr.bf16.mxu0 0
    %437 = vmatpush2.bf16.msra.mxu0 0
    %438 = vmatprep.subr.bf16.mxu0 0
    %439 = vmatpush2.bf16.msra.mxu0 0
    %440 = vmatprep.subr.bf16.mxu0 0
    %441 = vmatpush2.bf16.msra.mxu0 0
    %442 = vmatprep.subr.bf16.mxu0 0
    %443 = vmatpush2.bf16.msra.mxu0 0
    %444 = vmatprep.mubr.bf16.mxu0 0
    %445 = vmatmul.mubr.bf16.gmra.mxu0 %v333
    %v446 = vpop.f32.mrf.mxu0
    %v447 = vadd.f32 %v362, %v446
    %v448 = vpop.f32.mrf.mxu0
    %v449 = vpop.f32.mrf.mxu0
    %v450 = vadd.f32 %v362, %v449
    %v451 = vpop.f32.mrf.mxu0
    %452 = vmatprep.mubr.bf16.mxu0 0
    %453 = vmatmul.mubr.bf16.gmra.mxu0 %v334
    %v454 = vpop.f32.mrf.mxu0
    %v455 = vadd.f32 %v362, %v454
    %v456 = vpop.f32.mrf.mxu0
    %v457 = vpop.f32.mrf.mxu0
    %v458 = vadd.f32 %v362, %v457
    %v459 = vpop.f32.mrf.mxu0
    %460 = vmatprep.mubr.bf16.mxu0 0
    %461 = vmatmul.mubr.bf16.gmra.mxu0 %v335
    %v462 = vpop.f32.mrf.mxu0
    %v463 = vadd.f32 %v362, %v462
    %v464 = vpop.f32.mrf.mxu0
    %v465 = vpop.f32.mrf.mxu0
    %v466 = vadd.f32 %v362, %v465
    %v467 = vpop.f32.mrf.mxu0
    %468 = vmatprep.mubr.bf16.mxu0 0
    %469 = vmatmul.mubr.bf16.gmra.mxu0 %v336
    %v470 = vpop.f32.mrf.mxu0
    %v471 = vadd.f32 %v362, %v470
    %v472 = vpop.f32.mrf.mxu0
    %v473 = vpop.f32.mrf.mxu0
    %v474 = vadd.f32 %v362, %v473
    %v475 = vpop.f32.mrf.mxu0
    %476 = vmatprep.mubr.bf16.mxu0 0
    %477 = vmatmul.mubr.bf16.gmra.mxu0 %v337
    %v478 = vpop.f32.mrf.mxu0
    %v479 = vadd.f32 %v362, %v478
    %v480 = vpop.f32.mrf.mxu0
    %v481 = vpop.f32.mrf.mxu0
    %v482 = vadd.f32 %v362, %v481
    %v483 = vpop.f32.mrf.mxu0
    %484 = vmatprep.mubr.bf16.mxu0 0
    %485 = vmatmul.mubr.bf16.gmra.mxu0 %v338
    %v486 = vpop.f32.mrf.mxu0
    %v487 = vadd.f32 %v362, %v486
    %v488 = vpop.f32.mrf.mxu0
    %v489 = vpop.f32.mrf.mxu0
    %v490 = vadd.f32 %v362, %v489
    %v491 = vpop.f32.mrf.mxu0
    %492 = vmatprep.mubr.bf16.mxu0 0
    %493 = vmatmul.mubr.bf16.gmra.mxu0 %v339
    %v494 = vpop.f32.mrf.mxu0
    %v495 = vadd.f32 %v362, %v494
    %v496 = vpop.f32.mrf.mxu0
    %v497 = vpop.f32.mrf.mxu0
    %v498 = vadd.f32 %v362, %v497
    %v499 = vpop.f32.mrf.mxu0
    %500 = vmatprep.mubr.bf16.mxu0 0
    %501 = vmatmul.mubr.bf16.gmra.mxu0 %v340
    %v502 = vpop.f32.mrf.mxu0
    %v503 = vadd.f32 %v362, %v502
    %v504 = vpop.f32.mrf.mxu0
    %v505 = vpop.f32.mrf.mxu0
    %v506 = vadd.f32 %v362, %v505
    %v507 = vpop.f32.mrf.mxu0
    %508 = vdwg.mxu0
    %v509 = vmax.f32 %v447, 0.0
    %v510 = vmax.f32 %v450, 0.0
    %v511 = vmax.f32 %v455, 0.0
    %v512 = vmax.f32 %v458, 0.0
    %v513 = vmax.f32 %v463, 0.0
    %v514 = vmax.f32 %v466, 0.0
    %v515 = vmax.f32 %v471, 0.0
    %v516 = vmax.f32 %v474, 0.0
    %v517 = vmax.f32 %v479, 0.0
    %v518 = vmax.f32 %v482, 0.0
    %v519 = vmax.f32 %v487, 0.0
    %v520 = vmax.f32 %v490, 0.0
    %v521 = vmax.f32 %v495, 0.0
    %v522 = vmax.f32 %v498, 0.0
    %v523 = vmax.f32 %v503, 0.0
    %v524 = vmax.f32 %v506, 0.0
    %v525 = vld [vmem:[%s5] sm:$0xff]
    %v526 = vld [vmem:[%s5 + $0x8] sm:$0xff]
    %v527 = vld [vmem:[%s5 + $0x10] sm:$0xff]
    %v528 = vld [vmem:[%s5 + $0x18] sm:$0xff]
    %v529 = vld [vmem:[%s5 + $0x20] sm:$0xff]
    %v530 = vld [vmem:[%s5 + $0x28] sm:$0xff]
    %v531 = vld [vmem:[%s5 + $0x30] sm:$0xff]
    %v532 = vld [vmem:[%s5 + $0x38] sm:$0xff]
    %v533 = vld [vmem:[%s5 + $0x40] sm:$0xff]
    %v534 = vld [vmem:[%s5 + $0x48] sm:$0xff]
    %v535 = vld [vmem:[%s5 + $0x50] sm:$0xff]
    %v536 = vld [vmem:[%s5 + $0x58] sm:$0xff]
    %v537 = vld [vmem:[%s5 + $0x60] sm:$0xff]
    %v538 = vld [vmem:[%s5 + $0x68] sm:$0xff]
    %v539 = vld [vmem:[%s5 + $0x70] sm:$0xff]
    %v540 = vld [vmem:[%s5 + $0x78] sm:$0xff]
    %542 = vset.pattern.permute.xlu0 0
    %543 = vperm.xlu0 %542, %v525
    %v544 = vpop.permute.xlu0 %543
    %547 = vset.pattern.permute.xlu0 0
    %548 = vperm.xlu0 %547, %v526
    %v549 = vpop.permute.xlu0 %548
    %552 = vset.pattern.permute.xlu0 0
    %553 = vperm.xlu0 %552, %v527
    %v554 = vpop.permute.xlu0 %553
    %557 = vset.pattern.permute.xlu0 0
    %558 = vperm.xlu0 %557, %v528
    %v559 = vpop.permute.xlu0 %558
    %562 = vset.pattern.permute.xlu0 0
    %563 = vperm.xlu0 %562, %v529
    %v564 = vpop.permute.xlu0 %563
    %567 = vset.pattern.permute.xlu0 0
    %568 = vperm.xlu0 %567, %v530
    %v569 = vpop.permute.xlu0 %568
    %572 = vset.pattern.permute.xlu0 0
    %573 = vperm.xlu0 %572, %v531
    %v574 = vpop.permute.xlu0 %573
    %577 = vset.pattern.permute.xlu0 0
    %578 = vperm.xlu0 %577, %v532
    %v579 = vpop.permute.xlu0 %578
    %582 = vset.pattern.permute.xlu0 0
    %583 = vperm.xlu0 %582, %v533
    %v584 = vpop.permute.xlu0 %583
    %587 = vset.pattern.permute.xlu0 0
    %588 = vperm.xlu0 %587, %v534
    %v589 = vpop.permute.xlu0 %588
    %592 = vset.pattern.permute.xlu0 0
    %593 = vperm.xlu0 %592, %v535
    %v594 = vpop.permute.xlu0 %593
    %597 = vset.pattern.permute.xlu0 0
    %598 = vperm.xlu0 %597, %v536
    %v599 = vpop.permute.xlu0 %598
    %602 = vset.pattern.permute.xlu0 0
    %603 = vperm.xlu0 %602, %v537
    %v604 = vpop.permute.xlu0 %603
    %607 = vset.pattern.permute.xlu0 0
    %608 = vperm.xlu0 %607, %v538
    %v609 = vpop.permute.xlu0 %608
    %612 = vset.pattern.permute.xlu0 0
    %613 = vperm.xlu0 %612, %v539
    %v614 = vpop.permute.xlu0 %613
    %617 = vset.pattern.permute.xlu0 0
    %618 = vperm.xlu0 %617, %v540
    %v619 = vpop.permute.xlu0 %618
    %v621 = vmul.f32 %v509, %v544
    %v622 = vmul.f32 %v510, %v549
    %v623 = vmul.f32 %v511, %v554
    %v624 = vmul.f32 %v512, %v559
    %v625 = vmul.f32 %v513, %v564
    %v626 = vmul.f32 %v514, %v569
    %v627 = vmul.f32 %v515, %v574
    %v628 = vmul.f32 %v516, %v579
    %v629 = vmul.f32 %v517, %v584
    %v630 = vmul.f32 %v518, %v589
    %v631 = vmul.f32 %v519, %v594
    %v632 = vmul.f32 %v520, %v599
    %v633 = vmul.f32 %v521, %v604
    %v634 = vmul.f32 %v522, %v609
    %v635 = vmul.f32 %v523, %v614
    %v636 = vmul.f32 %v524, %v619
    %v637 = vpack.c.bf16 %v622, %v621
    %v638 = vpack.c.bf16 %v624, %v623
    %v639 = vpack.c.bf16 %v626, %v625
    %v640 = vpack.c.bf16 %v628, %v627
    %v641 = vpack.c.bf16 %v630, %v629
    %v642 = vpack.c.bf16 %v632, %v631
    %v643 = vpack.c.bf16 %v634, %v633
    %v644 = vpack.c.bf16 %v636, %v635
    %v653 = vunpack.c.l.b16 %v637
    %v654 = vunpack.c.h.b16 %v637
    %v655 = vunpack.c.l.b16 %v638
    %v656 = vunpack.c.h.b16 %v638
    %v657 = vunpack.c.l.b16 %v639
    %v658 = vunpack.c.h.b16 %v639
    %v659 = vunpack.c.l.b16 %v640
    %v660 = vunpack.c.h.b16 %v640
    %v661 = vunpack.c.l.b16 %v641
    %v662 = vunpack.c.h.b16 %v641
    %v663 = vunpack.c.l.b16 %v642
    %v664 = vunpack.c.h.b16 %v642
    %v665 = vunpack.c.l.b16 %v643
    %v666 = vunpack.c.h.b16 %v643
    %v667 = vunpack.c.l.b16 %v644
    %v668 = vunpack.c.h.b16 %v644
    %v669 = vpack.c.b16 %v653, %v653
    %v670 = vpack.c.b16 %v654, %v654
    %v671 = vpack.c.b16 %v655, %v655
    %v672 = vpack.c.b16 %v656, %v656
    %v673 = vpack.c.b16 %v657, %v657
    %v674 = vpack.c.b16 %v658, %v658
    %v675 = vpack.c.b16 %v659, %v659
    %v676 = vpack.c.b16 %v660, %v660
    %v677 = vpack.c.b16 %v661, %v661
    %v678 = vpack.c.b16 %v662, %v662
    %v679 = vpack.c.b16 %v663, %v663
    %v680 = vpack.c.b16 %v664, %v664
    %v681 = vpack.c.b16 %v665, %v665
    %v682 = vpack.c.b16 %v666, %v666
    %v683 = vpack.c.b16 %v667, %v667
    %v684 = vpack.c.b16 %v668, %v668
    %701 = vst [vmem:[%s6] sm:$0xf] %v669
    %702 = vst [vmem:[%s6 + $0x4] sm:$0xf] %v670
    %703 = vst [vmem:[%s6 + $0x8] sm:$0xf] %v671
    %704 = vst [vmem:[%s6 + $0xc] sm:$0xf] %v672
    %705 = vst [vmem:[%s6 + $0x10] sm:$0xf] %v673
    %706 = vst [vmem:[%s6 + $0x14] sm:$0xf] %v674
    %707 = vst [vmem:[%s6 + $0x18] sm:$0xf] %v675
    %708 = vst [vmem:[%s6 + $0x1c] sm:$0xf] %v676
    %709 = vst [vmem:[%s6 + $0x20] sm:$0xf] %v677
    %710 = vst [vmem:[%s6 + $0x24] sm:$0xf] %v678
    %711 = vst [vmem:[%s6 + $0x28] sm:$0xf] %v679
    %712 = vst [vmem:[%s6 + $0x2c] sm:$0xf] %v680
    %713 = vst [vmem:[%s6 + $0x30] sm:$0xf] %v681
    %714 = vst [vmem:[%s6 + $0x34] sm:$0xf] %v682
    %715 = vst [vmem:[%s6 + $0x38] sm:$0xf] %v683
    %716 = vst [vmem:[%s6 + $0x3c] sm:$0xf] %v684
    // Predicated region
    $region34: #{_lambda_.2} parent=1 // pred_check
      _
    $region35: #{_lambda_.2} parent=1 // pred_check_branch
      %718 = sbr.rel (0) target = $region37
    $region36: #{_lambda_.2} parent=1 // pred_region
      _
    $region37: #{_lambda_.2} parent=1 // pred_fallthru
      _
    // Predicated region
    $region38: #{_lambda_.2} parent=1 // pred_check
      _
    $region39: #{_lambda_.2} parent=1 // pred_check_branch
      %720 = sbr.rel (0) target = $region41
    $region40: #{_lambda_.2} parent=1 // pred_region
      _
    $region41: #{_lambda_.2} parent=1 // pred_fallthru
      _
    %721 = vsyncpa [#allocation4], 1
    %722 = vsyncpa [#allocation6], 1

</llo_original>
